<compile_context>
chip_gen: v7x
topology: tpu7x:2x2x1
jax: 0.10.0
libtpu: 0.0.40
codegen_flags: <defaults>
</compile_context>

<pallas_src>
import functools

import jax
import jax.numpy as jnp
from jax.experimental import pallas as pl
from jax.experimental.pallas import tpu as pltpu

TM = 8      # padded output rows   (f32 sublane minimum)
TK = 8      # padded weight rows   (f32 sublane minimum; real K is 4)
TN = 128    # padded out_features  (lane-dense output tile)
K_REAL = 4  # true contraction length


def _mm_kernel(m, choice_ref, x_ref, w_ref, o_ref):
    """out[r, :] = sum_k x[r, k] * w[choice, k, :].

    choice_ref : SMEM (1,) int32        -- consumed only by the weight index_map.
    x_ref      : SMEM (m*K_REAL,) f32   -- row-major flattened x (no padding).
    w_ref      : VMEM (1, TK, TN) f32   -- the chosen, zero-padded weight slab.
    o_ref      : VMEM (TM, TN) f32.
    """
    del choice_ref                       # only used by the index_map
    w = w_ref[0]                         # (TK, TN) -- a single f32 vreg

    if m < TM:                           # static; keep padding rows deterministic
        o_ref[...] = jnp.zeros((TM, TN), jnp.float32)

    for r in range(m):                   # static unroll over real rows
        # K_REAL scalar-splat FMAs per row -- architectural floor for this op.
        acc = x_ref[r * K_REAL] * w[0:1, :]
        for k in range(1, K_REAL):
            acc = acc + x_ref[r * K_REAL + k] * w[k:k + 1, :]
        o_ref[r:r + 1, :] = acc          # lane-dense (128-wide) row store


@jax.jit
def _forward_padded(x, w_stacked, choice_idx):
    """Single executable for every choice: pad-free x, runtime weight select."""
    m, _ = x.shape
    x_flat = x.astype(jnp.float32).reshape(-1)          # (m*K_REAL,) -> SMEM
    kernel = functools.partial(_mm_kernel, m)
    return pl.pallas_call(
        kernel,
        out_shape=jax.ShapeDtypeStruct((TM, TN), jnp.float32),
        grid_spec=pltpu.PrefetchScalarGridSpec(
            num_scalar_prefetch=1,
            grid=(1,),
            in_specs=[
                pl.BlockSpec(memory_space=pltpu.MemorySpace.SMEM),     # x_flat
                pl.BlockSpec((1, TK, TN), lambda i, c: (c[0], 0, 0)),  # chosen w
            ],
            out_specs=pl.BlockSpec((TM, TN), lambda i, c: (0, 0)),
        ),
        compiler_params=pltpu.CompilerParams(
            dimension_semantics=("arbitrary",)),
    )(choice_idx, x_flat, w_stacked)


class MyDictDense:
    """JAX/Pallas port of the PyTorch MyDictDense module."""

    _CHOICES = ("linear_01", "linear_02", "linear_03")

    def __init__(self, key):
        k1, k2, k3 = jax.random.split(key, 3)
        # nn.Parameter(torch.randn(...)) -> standard-normal init, float32.
        self.params = {
            "linear_01": jax.random.normal(k1, (4, 4), dtype=jnp.float32),
            "linear_02": jax.random.normal(k2, (4, 1), dtype=jnp.float32),
            "linear_03": jax.random.normal(k3, (4, 2), dtype=jnp.float32),
        }
        # Stack + zero-pad all weights ONCE into a single (3, TK, TN) tensor so
        # one pallas executable serves every choice (only the chosen 4 KiB slab
        # is DMA'd at run time via the scalar-prefetched index).
        stacked = jnp.zeros((len(self._CHOICES), TK, TN), jnp.float32)
        for i, name in enumerate(self._CHOICES):
            w = self.params[name]
            stacked = stacked.at[i, : w.shape[0], : w.shape[1]].set(w)
        self._w_stacked = stacked
        self._choice_idx = {
            name: jnp.array([i], dtype=jnp.int32)
            for i, name in enumerate(self._CHOICES)
        }
        self._out_features = {n: int(self.params[n].shape[1]) for n in self._CHOICES}

    def __call__(self, x, choice="linear_01"):
        m, k = x.shape
        if k != K_REAL:
            raise ValueError(f"expected x with {K_REAL} columns, got {k}")
        if m > TM:
            # TODO(synk): for batches larger than TM=8 add a row-tile grid with
            # dimension_semantics=("parallel",) to shard rows across v7x's two
            # TensorCores; not needed for this module's (1, 4) input.
            raise ValueError(f"batch {m} > {TM} not supported by this kernel")
        out = _forward_padded(x, self._w_stacked, self._choice_idx[choice])
        return out[:m, : self._out_features[choice]]


if __name__ == "__main__":
    key = jax.random.PRNGKey(0)
    net = MyDictDense(key)

    # x = torch.ones(1, 4)
    x = jnp.ones((1, 4), dtype=jnp.float32)

    ok = True
    for choice in ("linear_01", "linear_02", "linear_03"):
        y = jax.block_until_ready(net(x, choice=choice))
        y_ref = x @ net.params[choice]
        if y.shape != y_ref.shape or not jnp.allclose(y, y_ref, atol=1e-5, rtol=1e-5):
            ok = False
            print(f"MISMATCH for {choice}: got {y}, expected {y_ref}")

    if ok:
        print("KERNEL_OK")
</pallas_src>

<mosaic_0001>
module attributes {stable_mosaic.version = 11 : i64} {
  func.func @_mm_kernel(%arg0: i32, %arg1: memref<1xi32, #tpu.memory_space<smem>>, %arg2: memref<4xf32, #tpu.memory_space<smem>>, %arg3: memref<1x8x128xf32, #tpu.memory_space<vmem>>, %arg4: memref<8x128xf32, #tpu.memory_space<vmem>>) attributes {dimension_semantics = [#tpu.dimension_semantics<arbitrary>], iteration_bounds = array<i64: 1>, scalar_prefetch = 1 : i64, scratch_operands = 0 : i64, tpu.core_type = #tpu.core_type<tc>, window_params = [{transform_indices = @transform_0, window_bounds = array<i64: 4>}, {transform_indices = @transform_1, window_bounds = array<i64: 1, 8, 128>}, {pipeline_mode = #tpu.pipeline_mode<synchronous>, transform_indices = @transform_2, window_bounds = array<i64: 8, 128>}]} {
    %c0 = arith.constant 0 : index
    %c0_0 = arith.constant 0 : index
    %c0_1 = arith.constant 0 : index
    %0 = vector.load %arg3[%c0, %c0_0, %c0_1] : memref<1x8x128xf32, #tpu.memory_space<vmem>>, vector<1x8x128xf32>
    %1 = vector.shape_cast %0 : vector<1x8x128xf32> to vector<8x128xf32>
    %cst = arith.constant 0.000000e+00 : f32
    %2 = vector.broadcast %cst : f32 to vector<8x128xf32>
    %c0_2 = arith.constant 0 : index
    %c0_3 = arith.constant 0 : index
    %3 = vector.load %arg4[%c0_2, %c0_3] : memref<8x128xf32, #tpu.memory_space<vmem>>, vector<8x128xf32>
    tpu.vector_store %arg4[%c0_2, %c0_3], %2 {strides = array<i32>} : memref<8x128xf32, #tpu.memory_space<vmem>>, vector<8x128xf32>,
    %c0_4 = arith.constant 0 : index
    %4 = memref.load %arg2[%c0_4] : memref<4xf32, #tpu.memory_space<smem>>
    %5 = vector.extract_strided_slice %1 {offsets = [0, 0], sizes = [1, 128], strides = [1, 1]} : vector<8x128xf32> to vector<1x128xf32>
    %6 = vector.broadcast %4 : f32 to vector<1x128xf32>
    %7 = arith.mulf %6, %5 : vector<1x128xf32>
    %c1 = arith.constant 1 : index
    %8 = memref.load %arg2[%c1] : memref<4xf32, #tpu.memory_space<smem>>
    %9 = vector.extract_strided_slice %1 {offsets = [1, 0], sizes = [1, 128], strides = [1, 1]} : vector<8x128xf32> to vector<1x128xf32>
    %10 = vector.broadcast %8 : f32 to vector<1x128xf32>
    %11 = arith.mulf %10, %9 : vector<1x128xf32>
    %12 = arith.addf %7, %11 : vector<1x128xf32>
    %c2 = arith.constant 2 : index
    %13 = memref.load %arg2[%c2] : memref<4xf32, #tpu.memory_space<smem>>
    %14 = vector.extract_strided_slice %1 {offsets = [2, 0], sizes = [1, 128], strides = [1, 1]} : vector<8x128xf32> to vector<1x128xf32>
    %15 = vector.broadcast %13 : f32 to vector<1x128xf32>
    %16 = arith.mulf %15, %14 : vector<1x128xf32>
    %17 = arith.addf %12, %16 : vector<1x128xf32>
    %c3 = arith.constant 3 : index
    %18 = memref.load %arg2[%c3] : memref<4xf32, #tpu.memory_space<smem>>
    %19 = vector.extract_strided_slice %1 {offsets = [3, 0], sizes = [1, 128], strides = [1, 1]} : vector<8x128xf32> to vector<1x128xf32>
    %20 = vector.broadcast %18 : f32 to vector<1x128xf32>
    %21 = arith.mulf %20, %19 : vector<1x128xf32>
    %22 = arith.addf %17, %21 : vector<1x128xf32>
    %c0_5 = arith.constant 0 : index
    %c0_6 = arith.constant 0 : index
    %23 = vector.load %arg4[%c0_5, %c0_6] : memref<8x128xf32, #tpu.memory_space<vmem>>, vector<1x128xf32>
    tpu.vector_store %arg4[%c0_5, %c0_6], %22 {strides = array<i32>} : memref<8x128xf32, #tpu.memory_space<vmem>>, vector<1x128xf32>,
    return
  }
  func.func @transform_0(%arg0: i32, %arg1: memref<1xi32, #tpu.memory_space<smem>>) -> i32 {
    %c0_i32 = arith.constant 0 : i32
    %c0_i32_0 = arith.constant 0 : i32
    return %c0_i32 : i32
  }
  func.func @transform_1(%arg0: i32, %arg1: memref<1xi32, #tpu.memory_space<smem>>) -> (i32, i32, i32) {
    %c0 = arith.constant 0 : index
    %0 = memref.load %arg1[%c0] : memref<1xi32, #tpu.memory_space<smem>>
    %c0_i32 = arith.constant 0 : i32
    %c0_i32_0 = arith.constant 0 : i32
    %c0_i32_1 = arith.constant 0 : i32
    return %0, %c0_i32, %c0_i32_0 : i32, i32, i32
  }
  func.func @transform_2(%arg0: i32, %arg1: memref<1xi32, #tpu.memory_space<smem>>) -> (i32, i32) {
    %c0_i32 = arith.constant 0 : i32
    %c0_i32_0 = arith.constant 0 : i32
    %c0_i32_1 = arith.constant 0 : i32
    return %c0_i32, %c0_i32_0 : i32, i32
  }
}

</mosaic_0001>

<llo_original>
// kernel: _forward_padded.1
$region0: #{_forward_padded.1}
  #allocation0 [shape = 'u32[]', space=smem, size = 0x4, offset = 0x4, fixed_abs, tag = 'smem constant byte address 0x4 - core index']
  #allocation1 [shape = 'u32[144,128]{1,0:T(1,128)}', space=vmem, size = 0x12000, scoped, tag = 'internal scratch']
  #allocation2 [shape = 's32[1]{0}', space=sflag, size = 0x4, scoped, tag = 'scoped memory for _forward_padded.1']
  #allocation3 [shape = 's32[1]{0:T(128)S(6)}', space=smem, size = 0x200, scoped, tag = 'prefetched SMEM operand 0']
  %s0 = inlined_call_operand.<no memory space> [shape: s32[1], index: 0, kind: input, shape index: {}]
  %s1 = inlined_call_operand.vmem [shape: f32[4], index: 1, kind: input, shape index: {}]
  %s2 = inlined_call_operand.hbm [shape: f32[3,8,128], index: 2, kind: input, shape index: {}]
  %s3 = inlined_call_operand.hbm [shape: f32[8,128], index: 3, kind: output, shape index: {}]
  %s4 = sld [smem:[#allocation0]]
  $region26: #{_forward_padded.1} parent=0
    _
  %s6 = ssub.s32 1, %s4
  %s7 = scalar_select 0, %s6, %s4
  %8 = sst [smem:[#allocation3]] %s0
  $region1: #{_forward_padded.1} parent=0
    #allocation4 [shape = 'u8[512]{0}', space=smem, size = 0x200, scoped, tag = 'input window, operand 1, single buffered']
    #allocation5 [shape = 's32[1]{0}', space=sflag, size = 0x4, scoped, tag = 'scoped memory for _forward_padded.1']
    #allocation6 [shape = 's32[1]{0}', space=sflag, size = 0x4, scoped, tag = 'scoped memory for _forward_padded.1']
    #allocation7 [shape = 's32[1]{0}', space=sflag, size = 0x4, scoped, tag = 'scoped memory for _forward_padded.1']
    #allocation8 [shape = 'u8[4096]{0}', space=vmem, size = 0x1000, scoped, tag = 'input window, operand 2, single buffered']
    #allocation9 [shape = 'u8[4096]{0}', space=vmem, size = 0x1000, scoped, tag = 'output window, operand 0, single buffered']
    %9 = vsyncpa [#allocation7], 0
    %10 = vsyncpa [#allocation5], 0
    %11 = vsyncpa [#allocation6], 0
    // Predicated region
    $region2: #{_forward_padded.1} parent=1 // pred_check
      _
    $region3: #{_forward_padded.1} parent=1 // pred_check_branch
      %13 = sbr.rel (0) target = $region5
    $region4: #{_forward_padded.1} parent=1 // pred_region
      %s15 = ssub.s32 16, 16
      %16 = vsyncadd [#allocation7], %s15
      %s18 = sshll.u32 %s1, 4
      %s19 = int_to_ptr.vmem [resolvable:$true] %s18
      %21 = dma.vmem_to_smem %s19, 16, [#allocation4], [#allocation7]
    $region5: #{_forward_padded.1} parent=1 // pred_fallthru
      _
    // Predicated region
    $region6: #{_forward_padded.1} parent=1 // pred_check
      _
    $region7: #{_forward_padded.1} parent=1 // pred_check_branch
      %23 = sbr.rel (0) target = $region9
    $region8: #{_forward_padded.1} parent=1 // pred_region
      %s24 = sld [smem:[#allocation3]]
      %s26 = ssub.s32 128, 128
      %27 = vsyncadd [#allocation5], %s26
      %s28 = smul.addr %s24, 128
      %s29 = scalar_lea.hbm %s2, %s28
      %s31 = sshll.u32 [#allocation8], 4
      %s32 = int_to_ptr.vmem [resolvable:$true] %s31
      %34 = dma.hbm_to_vmem [thread:$0]  %s29, 128, %s32, [#allocation5]
    $region9: #{_forward_padded.1} parent=1 // pred_fallthru
      _
    // Predicated region
    $region10: #{_forward_padded.1} parent=1 // pred_check
      _
    $region11: #{_forward_padded.1} parent=1 // pred_check_branch
      %36 = sbr.rel (0) target = $region13
    $region12: #{_forward_padded.1} parent=1 // pred_region
      %37 = dma.done [#allocation7], 16
    $region13: #{_forward_padded.1} parent=1 // pred_fallthru
      _
    // Predicated region
    $region14: #{_forward_padded.1} parent=1 // pred_check
      _
    $region15: #{_forward_padded.1} parent=1 // pred_check_branch
      %39 = sbr.rel (0) target = $region17
    $region16: #{_forward_padded.1} parent=1 // pred_region
      %40 = dma.done [#allocation5], 128
    $region17: #{_forward_padded.1} parent=1 // pred_fallthru
      _
    %41 = sfence
    %s42 = sld [smem:[#allocation3]]
    %v43 = vld [vmem:[#allocation8] sm:$0xff]
    %44 = vst [vmem:[#allocation9] sm:$0xff] 0.0
    %s45 = sld [smem:[#allocation4]]
    %v46 = vstv %s45
    %v47 = vmul.f32 %v46, %v43
    %s48 = sld [smem:[#allocation4 + $0x1]]
    %v49 = vstv %s48
    %v50 = vmul.f32 %v49, %v43
    %v52 = vrot.slane %v50, 1
    %v54 = vadd.f32 %v47, %v52
    %s55 = sld [smem:[#allocation4 + $0x2]]
    %v56 = vstv %s55
    %v57 = vmul.f32 %v56, %v43
    %v59 = vrot.slane %v57, 2
    %v61 = vadd.f32 %v54, %v59
    %s62 = sld [smem:[#allocation4 + $0x3]]
    %v63 = vstv %s62
    %v64 = vmul.f32 %v63, %v43
    %v66 = vrot.slane %v64, 3
    %v68 = vadd.f32 %v61, %v66
    %69 = vst [vmem:[#allocation9] sm:$0x1] %v68
    // Predicated region
    $region18: #{_forward_padded.1} parent=1 // pred_check
      _
    $region19: #{_forward_padded.1} parent=1 // pred_check_branch
      %71 = sbr.rel (0) target = $region21
    $region20: #{_forward_padded.1} parent=1 // pred_region
      %s73 = ssub.s32 128, 128
      %74 = vsyncadd [#allocation6], %s73
      %s76 = sshll.u32 [#allocation9], 4
      %s77 = int_to_ptr.vmem [resolvable:$true] %s76
      %79 = dma.vmem_to_hbm [thread:$0]  %s77, 128, %s3, [#allocation6]
    $region21: #{_forward_padded.1} parent=1 // pred_fallthru
      _
    // Predicated region
    $region22: #{_forward_padded.1} parent=1 // pred_check
      _
    $region23: #{_forward_padded.1} parent=1 // pred_check_branch
      %81 = sbr.rel (0) target = $region25
    $region24: #{_forward_padded.1} parent=1 // pred_region
      %82 = dma.done [#allocation6], 128
    $region25: #{_forward_padded.1} parent=1 // pred_fallthru
      _
    %83 = vsyncpa [#allocation5], 1
    %84 = vsyncpa [#allocation6], 1
    %85 = vsyncpa [#allocation7], 1

</llo_original>
